<compile_context>
chip_gen: v7x
topology: tpu7x:2x2x1
jax: 0.10.0
libtpu: 0.0.40
codegen_flags: <defaults>
</compile_context>

<pallas_src>
import jax
import jax.numpy as jnp
from jax.experimental import pallas as pl
from jax.experimental.pallas import tpu as pltpu


def _round_up(x, m):
    return (x + m - 1) // m * m


def _cosine_activation_kernel(tau_ref, w_ref, b_ref, out_ref):
    tau = tau_ref[...].astype(jnp.float32)   # (TB, Din)
    w = w_ref[...].astype(jnp.float32)       # (Din, 2F) fused weights, VMEM-resident
    b = b_ref[...].astype(jnp.float32)       # (1, 2F)   fused biases,  VMEM-resident

    tb, din = tau.shape
    two_f = w.shape[1]
    f = two_f // 2

    if din <= 8:
        # Tiny contraction depth: MXU push/drain latency dominates, so compute the
        # contraction as an unrolled VPU broadcast-FMA instead (Din is static).
        acc = jnp.broadcast_to(b, (tb, two_f))
        for k in range(din):
            acc = acc + tau[:, k:k + 1] * w[k:k + 1, :]
    else:
        acc = jnp.dot(tau, w, preferred_element_type=jnp.float32) + b

    # cos on the first F columns (cosine branch), identity on the rest (linear
    # branch). One dense full-block store; no concatenate, no partial-lane stores.
    col = jax.lax.broadcasted_iota(jnp.int32, acc.shape, dimension=1)
    out_ref[...] = jnp.where(col < f, jnp.cos(acc), acc).astype(out_ref.dtype)


def cosine_activation(tau, weight_linear, bias_linear, weight_periodic, bias_periodic,
                      *, block_b=1024):
    """Pallas forward for Time2Vec CosineActivation.

    block_b: batch tile (rows per grid step). 1024 rows of f32 activations is
    comfortably inside the scoped-VMEM budget on v5e (16 MiB) / v6e (32 MiB) /
    v7x (32 MiB default, 64 MiB physical) even double-buffered, while being
    large enough to amortize the ~0.35 us per-grid-step overhead.
    """
    B, Din = tau.shape
    F = weight_linear.shape[1]
    out_dtype = tau.dtype

    # Fuse both branches into a single (Din, 2F) contraction.
    w_fused = jnp.concatenate([weight_linear, weight_periodic], axis=1).astype(jnp.float32)
    b_fused = jnp.concatenate([bias_linear, bias_periodic], axis=0).reshape(1, 2 * F).astype(jnp.float32)

    # Batch tile: multiple of 8 (sublane), capped so small problems use one step.
    tb = min(block_b, _round_up(B, 8))
    tb = _round_up(tb, 8)
    b_pad = _round_up(B, tb)

    tau_p = tau if b_pad == B else jnp.pad(tau, ((0, b_pad - B), (0, 0)))

    grid = (b_pad // tb,)

    cost = pl.CostEstimate(
        flops=2 * b_pad * Din * (2 * F),
        transcendentals=b_pad * F,
        bytes_accessed=4 * (b_pad * Din + Din * 2 * F + 2 * F + b_pad * 2 * F),
    )

    out = pl.pallas_call(
        _cosine_activation_kernel,
        out_shape=jax.ShapeDtypeStruct((b_pad, 2 * F), out_dtype),
        grid=grid,
        in_specs=[
            pl.BlockSpec((tb, Din), lambda i: (i, 0)),       # tau: tiled over batch
            pl.BlockSpec((Din, 2 * F), lambda i: (0, 0)),    # fused weights: resident
            pl.BlockSpec((1, 2 * F), lambda i: (0, 0)),      # fused biases:  resident
        ],
        out_specs=pl.BlockSpec((tb, 2 * F), lambda i: (i, 0)),
        compiler_params=pltpu.CompilerParams(
            dimension_semantics=("parallel",),               # megacore-shard the batch axis
        ),
        cost_estimate=cost,
    )(tau_p, w_fused, b_fused)

    return out[:B] if b_pad != B else out


def cosine_activation_ref(tau, wl, bl, wp, bp):
    v1 = jnp.cos(tau @ wl + bl)
    v2 = tau @ wp + bp
    return jnp.concatenate([v1, v2], axis=-1)


if __name__ == "__main__":
    key = jax.random.PRNGKey(0)
    k_tau, k_wl, k_bl, k_wp, k_bp = jax.random.split(key, 5)

    batch = 8
    in_features = 4
    output_features = 16

    tau = jax.random.normal(k_tau, (batch, in_features), dtype=jnp.float32)
    weight_linear = jax.random.normal(k_wl, (in_features, output_features), dtype=jnp.float32)
    bias_linear = jax.random.normal(k_bl, (output_features,), dtype=jnp.float32)
    weight_periodic = jax.random.normal(k_wp, (in_features, output_features), dtype=jnp.float32)
    bias_periodic = jax.random.normal(k_bp, (output_features,), dtype=jnp.float32)

    out = cosine_activation(tau, weight_linear, bias_linear, weight_periodic, bias_periodic)
    out = jax.block_until_ready(out)

    ref = cosine_activation_ref(tau, weight_linear, bias_linear, weight_periodic, bias_periodic)
    assert out.shape == (batch, 2 * output_features), out.shape
    assert jnp.allclose(out, ref, atol=1e-5, rtol=1e-5), "mismatch vs reference"

    # Exercise the batch-tiling / padding path once as well (B not a multiple of the tile).
    big_B = 1000
    tau_big = jax.random.normal(k_tau, (big_B, in_features), dtype=jnp.float32)
    out_big = jax.block_until_ready(
        cosine_activation(tau_big, weight_linear, bias_linear, weight_periodic, bias_periodic,
                          block_b=256)
    )
    ref_big = cosine_activation_ref(tau_big, weight_linear, bias_linear, weight_periodic, bias_periodic)
    assert out_big.shape == (big_B, 2 * output_features), out_big.shape
    assert jnp.allclose(out_big, ref_big, atol=1e-5, rtol=1e-5), "mismatch vs reference (tiled)"

    print("KERNEL_OK")
</pallas_src>

<mosaic_0001>
module attributes {stable_mosaic.version = 11 : i64} {
  func.func @_cosine_activation_kernel(%arg0: i32, %arg1: memref<8x4xf32, #tpu.memory_space<vmem>>, %arg2: memref<4x32xf32, #tpu.memory_space<vmem>>, %arg3: memref<1x32xf32, #tpu.memory_space<vmem>>, %arg4: memref<8x32xf32, #tpu.memory_space<vmem>>) attributes {dimension_semantics = [#tpu.dimension_semantics<parallel>], iteration_bounds = array<i64: 1>, scalar_prefetch = 0 : i64, scratch_operands = 0 : i64, tpu.core_type = #tpu.core_type<tc>, window_params = [{transform_indices = @transform_0, window_bounds = array<i64: 8, 4>}, {pipeline_mode = #tpu.pipeline_mode<synchronous>, transform_indices = @transform_1, window_bounds = array<i64: 4, 32>}, {pipeline_mode = #tpu.pipeline_mode<synchronous>, transform_indices = @transform_2, window_bounds = array<i64: 1, 32>}, {transform_indices = @transform_3, window_bounds = array<i64: 8, 32>}]} {
    %c0 = arith.constant 0 : index
    %c0_0 = arith.constant 0 : index
    %0 = vector.load %arg1[%c0, %c0_0] : memref<8x4xf32, #tpu.memory_space<vmem>>, vector<8x4xf32>
    %c0_1 = arith.constant 0 : index
    %c0_2 = arith.constant 0 : index
    %1 = vector.load %arg2[%c0_1, %c0_2] : memref<4x32xf32, #tpu.memory_space<vmem>>, vector<4x32xf32>
    %c0_3 = arith.constant 0 : index
    %c0_4 = arith.constant 0 : index
    %2 = vector.load %arg3[%c0_3, %c0_4] : memref<1x32xf32, #tpu.memory_space<vmem>>, vector<1x32xf32>
    %3 = vector.shape_cast %2 : vector<1x32xf32> to vector<1x32xf32>
    %4 = vector.broadcast %3 : vector<1x32xf32> to vector<8x32xf32>
    %5 = vector.extract_strided_slice %0 {offsets = [0, 0], sizes = [8, 1], strides = [1, 1]} : vector<8x4xf32> to vector<8x1xf32>
    %6 = vector.extract_strided_slice %1 {offsets = [0, 0], sizes = [1, 32], strides = [1, 1]} : vector<4x32xf32> to vector<1x32xf32>
    %7 = vector.broadcast %5 : vector<8x1xf32> to vector<8x32xf32>
    %8 = vector.broadcast %6 : vector<1x32xf32> to vector<8x32xf32>
    %9 = arith.mulf %7, %8 : vector<8x32xf32>
    %10 = arith.addf %4, %9 : vector<8x32xf32>
    %11 = vector.extract_strided_slice %0 {offsets = [0, 1], sizes = [8, 1], strides = [1, 1]} : vector<8x4xf32> to vector<8x1xf32>
    %12 = vector.extract_strided_slice %1 {offsets = [1, 0], sizes = [1, 32], strides = [1, 1]} : vector<4x32xf32> to vector<1x32xf32>
    %13 = vector.broadcast %11 : vector<8x1xf32> to vector<8x32xf32>
    %14 = vector.broadcast %12 : vector<1x32xf32> to vector<8x32xf32>
    %15 = arith.mulf %13, %14 : vector<8x32xf32>
    %16 = arith.addf %10, %15 : vector<8x32xf32>
    %17 = vector.extract_strided_slice %0 {offsets = [0, 2], sizes = [8, 1], strides = [1, 1]} : vector<8x4xf32> to vector<8x1xf32>
    %18 = vector.extract_strided_slice %1 {offsets = [2, 0], sizes = [1, 32], strides = [1, 1]} : vector<4x32xf32> to vector<1x32xf32>
    %19 = vector.broadcast %17 : vector<8x1xf32> to vector<8x32xf32>
    %20 = vector.broadcast %18 : vector<1x32xf32> to vector<8x32xf32>
    %21 = arith.mulf %19, %20 : vector<8x32xf32>
    %22 = arith.addf %16, %21 : vector<8x32xf32>
    %23 = vector.extract_strided_slice %0 {offsets = [0, 3], sizes = [8, 1], strides = [1, 1]} : vector<8x4xf32> to vector<8x1xf32>
    %24 = vector.extract_strided_slice %1 {offsets = [3, 0], sizes = [1, 32], strides = [1, 1]} : vector<4x32xf32> to vector<1x32xf32>
    %25 = vector.broadcast %23 : vector<8x1xf32> to vector<8x32xf32>
    %26 = vector.broadcast %24 : vector<1x32xf32> to vector<8x32xf32>
    %27 = arith.mulf %25, %26 : vector<8x32xf32>
    %28 = arith.addf %22, %27 : vector<8x32xf32>
    %29 = tpu.iota {dimensions = array<i32: 1>} : vector<8x32xi32>
    %c16_i32 = arith.constant 16 : i32
    %30 = vector.broadcast %c16_i32 : i32 to vector<8x32xi32>
    %31 = arith.cmpi slt, %29, %30 : vector<8x32xi32>
    %32 = math.cos %28 : vector<8x32xf32>
    %33 = arith.select %31, %32, %28 : vector<8x32xi1>, vector<8x32xf32>
    %c0_5 = arith.constant 0 : index
    %c0_6 = arith.constant 0 : index
    %34 = vector.load %arg4[%c0_5, %c0_6] : memref<8x32xf32, #tpu.memory_space<vmem>>, vector<8x32xf32>
    tpu.vector_store %arg4[%c0_5, %c0_6], %33 {strides = array<i32>} : memref<8x32xf32, #tpu.memory_space<vmem>>, vector<8x32xf32>,
    return
  }
  func.func @transform_0(%arg0: i32) -> (i32, i32) {
    %c0_i32 = arith.constant 0 : i32
    %c0_i32_0 = arith.constant 0 : i32
    return %arg0, %c0_i32 : i32, i32
  }
  func.func @transform_1(%arg0: i32) -> (i32, i32) {
    %c0_i32 = arith.constant 0 : i32
    %c0_i32_0 = arith.constant 0 : i32
    %c0_i32_1 = arith.constant 0 : i32
    return %c0_i32, %c0_i32_0 : i32, i32
  }
  func.func @transform_2(%arg0: i32) -> (i32, i32) {
    %c0_i32 = arith.constant 0 : i32
    %c0_i32_0 = arith.constant 0 : i32
    %c0_i32_1 = arith.constant 0 : i32
    return %c0_i32, %c0_i32_0 : i32, i32
  }
  func.func @transform_3(%arg0: i32) -> (i32, i32) {
    %c0_i32 = arith.constant 0 : i32
    %c0_i32_0 = arith.constant 0 : i32
    return %arg0, %c0_i32 : i32, i32
  }
}

</mosaic_0001>

<llo_original>
// kernel: tpu_custom_call.1
$region0: #{tpu_custom_call.1}
  #allocation0 [shape = 'u32[]', space=smem, size = 0x4, offset = 0x4, fixed_abs, tag = 'smem constant byte address 0x4 - core index']
  #allocation1 [shape = 'u32[144,128]{1,0:T(1,128)}', space=vmem, size = 0x12000, scoped, tag = 'internal scratch']
  %s0 = inlined_call_operand.vmem [shape: f32[8,4], index: 0, kind: input, shape index: {}]
  %s1 = inlined_call_operand.vmem [shape: f32[4,32], index: 1, kind: input, shape index: {}]
  %s2 = inlined_call_operand.vmem [shape: f32[1,32], index: 2, kind: input, shape index: {}]
  %s3 = inlined_call_operand.hbm [shape: f32[8,32], index: 3, kind: output, shape index: {}]
  %s4 = sld [smem:[#allocation0]]
  $region22: #{tpu_custom_call.1} parent=0
    _
  %s6 = ssub.s32 1, %s4
  %s7 = scalar_select 0, %s6, %s4
  $region1: #{tpu_custom_call.1} parent=0
    #allocation2 [shape = 'u8[4096]{0}', space=vmem, size = 0x1000, scoped, tag = 'output window, operand 0, single buffered']
    #allocation3 [shape = 's32[1]{0}', space=sflag, size = 0x4, scoped, tag = 'scoped memory for tpu_custom_call.1']
    %8 = vsyncpa [#allocation3], 0
    // Predicated region
    $region2: #{tpu_custom_call.1} parent=1 // pred_check
      _
    $region3: #{tpu_custom_call.1} parent=1 // pred_check_branch
      %10 = sbr.rel (0) target = $region5
    $region4: #{tpu_custom_call.1} parent=1 // pred_region
      _
    $region5: #{tpu_custom_call.1} parent=1 // pred_fallthru
      _
    // Predicated region
    $region6: #{tpu_custom_call.1} parent=1 // pred_check
      _
    $region7: #{tpu_custom_call.1} parent=1 // pred_check_branch
      %12 = sbr.rel (0) target = $region9
    $region8: #{tpu_custom_call.1} parent=1 // pred_region
      _
    $region9: #{tpu_custom_call.1} parent=1 // pred_fallthru
      _
    // Predicated region
    $region10: #{tpu_custom_call.1} parent=1 // pred_check
      _
    $region11: #{tpu_custom_call.1} parent=1 // pred_check_branch
      %14 = sbr.rel (0) target = $region13
    $region12: #{tpu_custom_call.1} parent=1 // pred_region
      _
    $region13: #{tpu_custom_call.1} parent=1 // pred_fallthru
      _
    %v15 = vld [vmem:[%s0] sm:$0xff]
    %v16 = vld [vmem:[%s1] sm:$0xf]
    %v17 = vld [vmem:[%s2] sm:$0x1]
    %v19 = vlaneseq
    %v20 = vshrl.u32 %v19, 7
    %v21 = vsub.s32 0, %v20
    %v22 = vrot.slane %v17, %v21
    %25 = vset.pattern.permute.xlu0 0
    %26 = vperm.xlu0 %25, %v15
    %v27 = vpop.permute.xlu0 %26
    %v29 = vlaneseq
    %v30 = vshrl.u32 %v29, 7
    %v31 = vsub.s32 0, %v30
    %v32 = vrot.slane %v16, %v31
    %v33 = vmul.f32 %v27, %v32
    %v34 = vadd.f32 %v22, %v33
    %35 = vset.pattern.permute.xlu0 1
    %36 = vperm.xlu0 %35, %v15
    %v37 = vpop.permute.xlu0 %36
    %v39 = vlaneseq
    %v40 = vshrl.u32 %v39, 7
    %v41 = vsub.s32 1, %v40
    %v42 = vrot.slane %v16, %v41
    %v43 = vmul.f32 %v37, %v42
    %v44 = vadd.f32 %v34, %v43
    %45 = vset.pattern.permute.xlu0 2
    %46 = vperm.xlu0 %45, %v15
    %v47 = vpop.permute.xlu0 %46
    %v49 = vlaneseq
    %v50 = vshrl.u32 %v49, 7
    %v51 = vsub.s32 2, %v50
    %v52 = vrot.slane %v16, %v51
    %v53 = vmul.f32 %v47, %v52
    %v54 = vadd.f32 %v44, %v53
    %55 = vset.pattern.permute.xlu0 3
    %56 = vperm.xlu0 %55, %v15
    %v57 = vpop.permute.xlu0 %56
    %v59 = vlaneseq
    %v60 = vshrl.u32 %v59, 7
    %v61 = vsub.s32 3, %v60
    %v62 = vrot.slane %v16, %v61
    %v63 = vmul.f32 %v57, %v62
    %v64 = vadd.f32 %v54, %v63
    %v65 = vlaneseq
    %v66 = vand.u32 %v65, 127
    %vm67 = vcmp.lt.s32.totalorder %v66, 16
    %v68 = vand.u32 2147483647, %v64
    %vm69 = vcmp.le.f32.partialorder %v68, 0.7853982
    %vm70 = vcmp.lt.s32.totalorder %v64, 0
    %v71 = vand.u32 %v64, 2139095040
    %v72 = vshrl.u32 %v71, 23
    %v73 = vsub.s32 %v72, 127
    %v74 = vand.u32 2147483647, %v64
    %v75 = vand.u32 %v74, 8388607
    %v76 = vor.u32 %v75, 8388608
    %v77 = vsub.s32 0, %v76
    %v78 = vadd.s32 %v73, 1
    %vm79 = vcmp.gt.s32.totalorder %v78, 0
    %v80 = vsel %vm79, %v78, 0
    %v81 = vshrl.u32 %v80, 5
    %v82 = vand.u32 %v80, 31
    %v83 = vsub.s32 32, %v82
    %v84 = vshrl.u32 683565275, %v83
    %v85 = vshll.u32 683565275, %v82
    %v86 = vshrl.u32 2475754826, %v83
    %v87 = vor.u32 %v85, %v86
    %v88 = vshll.u32 2475754826, %v82
    %v89 = vshrl.u32 2131351028, %v83
    %v90 = vor.u32 %v88, %v89
    %v91 = vshll.u32 2131351028, %v82
    %v92 = vshrl.u32 2102212464, %v83
    %v93 = vor.u32 %v91, %v92
    %v94 = vshll.u32 2102212464, %v82
    %v95 = vshrl.u32 920167782, %v83
    %v96 = vor.u32 %v94, %v95
    %v97 = vshll.u32 920167782, %v82
    %v98 = vshrl.u32 1326507024, %v83
    %v99 = vor.u32 %v97, %v98
    %vm100 = vcmp.lt.s32.totalorder %v81, 1
    %vm101 = vcmp.lt.s32.totalorder %v81, 2
    %vm102 = vcmp.lt.s32.totalorder %v81, 3
    %vm103 = vcmp.lt.s32.totalorder %v81, 4
    %v104 = vsel %vm100, %v84, %v87
    %v105 = vsel %vm103, %v93, 2102212464
    %v106 = vsel %vm102, %v90, %v105
    %v107 = vsel %vm101, %v104, %v106
    %v108 = vsel %vm100, %v87, %v90
    %v109 = vsel %vm103, %v96, 920167782
    %v110 = vsel %vm102, %v93, %v109
    %v111 = vsel %vm101, %v108, %v110
    %v112 = vsel %vm100, %v90, %v93
    %v113 = vsel %vm103, %v99, 1326507024
    %v114 = vsel %vm102, %v96, %v113
    %v115 = vsel %vm101, %v112, %v114
    %v116 = vshll.u32 %v76, 8
    %v117 = vmul.u32.u64.compose %v116, %v115
    %v118 = vextract.low.u32 %v117
    %v119 = vextract.high.u32 %v117
    %v120 = vmul.u32.u64.compose %v116, %v111
    %v121 = vextract.low.u32 %v120
    %v122 = vextract.high.u32 %v120
    %v123 = vmul.u32 %v116, %v107
    %v124 = vadd.s32 %v119, %v121
    %vm125 = vc.u32 %v119, %v121
    %v126 = vadd.s32 %v122, 1
    %v127 = vsel %vm125, %v126, %v122
    %v128 = vadd.s32 %v123, %v127
    %v129 = vadd.s32 %v128, 536870912
    %v130 = vshrl.u32 %v129, 30
    %v131 = vshll.u32 %v130, 30
    %v132 = vsub.s32 %v128, %v131
    %vm133 = vcmp.lt.s32.totalorder %v132, 0
    %v134 = vsub.s32 0, %v132
    %v135 = vsel %vm133, %v134, %v132
    %v136 = vclz %v135
    %v137 = vsub.s32 %v136, 2
    %vm138 = vcmp.gt.s32.totalorder 0, %v137
    %v139 = vsel %vm138, 0, %v137
    %v140 = vsub.s32 32, %v139
    %v141 = vshll.u32 %v132, %v139
    %v142 = vshrl.u32 %v124, %v140
    %v143 = vor.u32 %v141, %v142
    %v144 = vsub.s32 4294967266, %v139
    %v145 = vadd.s32 %v144, 127
    %v146 = vshll.u32 %v145, 23
    %v147 = vor.u32 4788187, %v146
    %v148 = vand.u32 2147483647, %v147
    %v150 = vcvt.s32.f32 %v143
    %v151 = vmul.f32 %v150, %v148
    %v152 = vxor.u32 %v151, 2147483648
    %v153 = vsel %vm70, %v152, %v151
    %v154 = vsub.s32 4, %v130
    %v155 = vsel %vm70, %v154, %v130
    %v156 = vsel %vm69, %v64, %v153
    %v157 = vsel %vm69, 0, %v155
    %v158 = vcosq.f32.pop %v156
    %v159 = vsinq.f32.pop %v156
    %vm160 = vweird.f32 %v64
    %v161 = vand.u32 %v157, 3
    %vm162 = vcmp.lt.s32.totalorder %v161, 2
    %vm163 = vcmp.eq.s32.totalorder %v161, 0
    %v164 = vxor.u32 %v159, 2147483648
    %v165 = vsel %vm163, %v158, %v164
    %vm166 = vcmp.eq.s32.totalorder %v161, 2
    %v167 = vxor.u32 %v158, 2147483648
    %v168 = vsel %vm166, %v167, %v159
    %v169 = vsel %vm162, %v165, %v168
    %v170 = vsel %vm160, nan, %v169
    %v171 = vsel %vm67, %v170, %v64
    %vm172 = vcmask 261120
    %173 = vst.msk [vmem:[#allocation2] sm:$0xff] %vm172, %v171
    // Predicated region
    $region14: #{tpu_custom_call.1} parent=1 // pred_check
      _
    $region15: #{tpu_custom_call.1} parent=1 // pred_check_branch
      %175 = sbr.rel (0) target = $region17
    $region16: #{tpu_custom_call.1} parent=1 // pred_region
      %s177 = ssub.s32 128, 128
      %178 = vsyncadd [#allocation3], %s177
      %s180 = sshll.u32 [#allocation2], 4
      %s181 = int_to_ptr.vmem [resolvable:$true] %s180
      %183 = dma.vmem_to_hbm [thread:$0]  %s181, 128, %s3, [#allocation3]
    $region17: #{tpu_custom_call.1} parent=1 // pred_fallthru
      _
    // Predicated region
    $region18: #{tpu_custom_call.1} parent=1 // pred_check
      _
    $region19: #{tpu_custom_call.1} parent=1 // pred_check_branch
      %185 = sbr.rel (0) target = $region21
    $region20: #{tpu_custom_call.1} parent=1 // pred_region
      %186 = dma.done [#allocation3], 128
    $region21: #{tpu_custom_call.1} parent=1 // pred_fallthru
      _
    %187 = vsyncpa [#allocation3], 1

</llo_original>
